<compile_context>
chip_gen: v5e
topology: v5e:2x2
jax: 0.10.0
libtpu: 0.0.40
codegen_flags: <defaults>
</compile_context>

<pallas_src>
import functools

import jax
import jax.numpy as jnp
from jax.experimental import pallas as pl
from jax.experimental.pallas import tpu as pltpu


def _round_up(a, m):
    return ((a + m - 1) // m) * m


def _tpu_flavor():
    """Returns (wide_mxu, tm_cap, vmem_physical_bytes) with safe defaults."""
    kind = ""
    try:
        kind = jax.devices()[0].device_kind.lower()
    except Exception:
        pass
    is_v5e = ("v5 lite" in kind) or ("v5e" in kind) or ("v5lite" in kind)
    is_128mib = is_v5e or ("v5p" in kind) or ("v6" in kind)     # 128 MiB VMEM parts
    wide_mxu = not is_v5e                                       # 256-wide MXU on v6e/v7x
    vmem_phys = (128 << 20) if is_128mib else (64 << 20)        # conservative otherwise
    try:
        info = pltpu.get_tpu_info()                             # robust when available
        vmem_phys = int(getattr(info, "vmem_capacity_bytes", vmem_phys))
    except Exception:
        pass
    vmem_phys = max(vmem_phys, 48 << 20)
    tm_cap = 2048 if vmem_phys >= (128 << 20) else 1024         # cap tm on v7x/unknown
    return wide_mxu, tm_cap, vmem_phys


# ----------------------------------------------------------------------------
# conv 3x3 (padding=1, stride=1) + bias + ReLU
# ----------------------------------------------------------------------------
def _conv_relu_kernel(x_ref, w_ref, b_ref, o_ref, *, tap_offsets, tm):
    """One (Cout-tile, row-tile, image) grid step.

    x_ref : (Lw, K)     haloed window of the padded-flat image rows
                        [m*tm, m*tm + Lw); K is Cin, 3*Cin or 9*Cin.
    w_ref : (T, K, tco) one (K, tco) weight matrix per remaining tap.
    b_ref : (1, tco)    f32 bias.
    o_ref : (tm, tco)   rows [m*tm, (m+1)*tm) of the padded-flat output
                        (row h*(W+2)+w holds output pixel (h, w) for w < W).
    """
    tco = o_ref.shape[-1]
    acc = jnp.zeros((tm, tco), jnp.float32)
    # Consecutive MXU dots with only the accumulate between them -> Mosaic can
    # chain them through the MXU result buffer (MRB in-place acc on v7x).
    for t, off in enumerate(tap_offsets):          # unrolled (1, 3 or 9 taps)
        xs = x_ref[pl.ds(off, tm), :]              # static offset into the halo window
        acc = acc + jnp.dot(xs, w_ref[t], preferred_element_type=jnp.float32)
    o_ref[...] = jnp.maximum(acc + b_ref[...], 0.0).astype(o_ref.dtype)


def conv3x3_relu(x, w, b):
    """3x3 / pad=1 / stride=1 conv + bias + ReLU.

    x: (N,H,W,Cin) NHWC; w: (3,3,Cin,Cout) HWIO; b: (Cout,) f32.
    Returns (N,H,W,Cout) bf16.
    """
    N, H, W, Cin = x.shape
    Cout = w.shape[-1]
    Wp = W + 2                       # padded row stride (2 junk cols per output row)
    Lout = H * Wp                    # padded-flat output rows

    wide_mxu, tm_cap, vmem_phys = _tpu_flavor()

    # ---- Cout tile (MXU N dim) ----------------------------------------------
    tco = min(Cout, 256 if wide_mxu else 128)
    while Cout % tco:
        tco //= 2

    # ---- row (M) tile: no divisor requirement, hard-capped -------------------
    tm = min(tm_cap, _round_up(Lout, 8))
    MT = pl.cdiv(Lout, tm)
    Lpad = MT * tm                   # output rows padded up to a multiple of tm

    # ---- contraction (K) layout ----------------------------------------------
    # Merge taps into the contraction for small Cin so the MXU sees a deep K
    # instead of many shallow dots (conv1/conv2 layers).
    if Cin <= 4:                     # conv1_1: full im2col, K = 9*Cin, single tap
        d_list = tuple(kh * Wp + kw for kh in range(3) for kw in range(3))
        tap_offsets = (0,)
    elif Cin <= 64:                  # conv1_2 / conv2_1: merge kw, K = 3*Cin
        d_list = (0, 1, 2)
        tap_offsets = (0, Wp, 2 * Wp)
    else:                            # deep layers: K = Cin, 9 taps
        d_list = (0,)
        tap_offsets = tuple(kh * Wp + kw for kh in range(3) for kw in range(3))
    K = len(d_list) * Cin
    T = len(tap_offsets)
    maxoff = max(tap_offsets)
    Lw = tm + maxoff                 # haloed window rows per row tile
    nchunks = pl.cdiv(Lw, tm)

    # ---- padded-flat image (zero padding=1), channel-merged, over-padded -----
    xp = jnp.pad(x.astype(jnp.bfloat16), ((0, 0), (1, 1), (1, 1), (0, 0)))
    xf = xp.reshape(N, (H + 2) * Wp, Cin)
    xc_rows = Lpad + (nchunks - 1) * tm            # rows the window build reads
    need_rows = xc_rows + max(d_list)              # rows the channel merge reads
    have_rows = (H + 2) * Wp
    if need_rows > have_rows:                      # slack so every slice is in-bounds
        xf = jnp.pad(xf, ((0, 0), (0, need_rows - have_rows), (0, 0)))
    if len(d_list) == 1:
        xc = xf[:, :xc_rows, :]
    else:                                          # all slices have length xc_rows
        xc = jnp.concatenate([xf[:, d:d + xc_rows, :] for d in d_list], axis=-1)

    # ---- haloed per-row-tile windows: (N*MT, Lw, K) ---------------------------
    parts = [xc[:, j * tm:j * tm + Lpad, :].reshape(N, MT, tm, K)
             for j in range(nchunks)]
    xw = parts[0] if nchunks == 1 else jnp.concatenate(parts, axis=2)[:, :, :Lw, :]
    xw = xw.reshape(N * MT, Lw, K)

    wf = w.astype(jnp.bfloat16).reshape(T, K, Cout)
    bf = b.reshape(1, Cout).astype(jnp.float32)

    # ---- VMEM budget (double-buffered blocks + f32 accumulator) --------------
    blk_bytes = (2 * Lw * K * 2 + 2 * T * K * tco * 2 + 2 * tm * tco * 2
                 + tm * tco * 4 + 2 * tco * 4)
    vmem_limit = int(min(max(2 * blk_bytes, 32 << 20), vmem_phys - (16 << 20)))

    # Cout tiles lead (weights stay VMEM-resident across inner axes); row tiles
    # give a >=2-extent parallel axis even when Cout//tco == 1.
    grid = (Cout // tco, MT, N)

    out = pl.pallas_call(
        functools.partial(_conv_relu_kernel, tap_offsets=tap_offsets, tm=tm),
        out_shape=jax.ShapeDtypeStruct((N, Lpad, Cout), jnp.bfloat16),
        grid=grid,
        in_specs=[
            pl.BlockSpec((None, Lw, K), lambda c, m, n: (n * MT + m, 0, 0)),
            pl.BlockSpec((T, K, tco), lambda c, m, n: (0, 0, c)),
            pl.BlockSpec((1, tco), lambda c, m, n: (0, c)),
        ],
        out_specs=pl.BlockSpec((None, tm, tco), lambda c, m, n: (n, m, c)),
        compiler_params=pltpu.CompilerParams(
            dimension_semantics=("parallel", "parallel", "parallel"),
            vmem_limit_bytes=vmem_limit,
        ),
    )(xw, wf, bf)
    # Drop the padded junk rows and the 2 junk columns of every padded-flat row.
    return out[:, :Lout, :].reshape(N, H, Wp, Cout)[:, :, :W, :]


# ----------------------------------------------------------------------------
# 2x2 / stride-2 max pool (floor), matching nn.MaxPool2d(2, 2)
# ----------------------------------------------------------------------------
def _maxpool2x2_kernel(x_ref, o_ref):
    # x_ref: (th, 2, Wo, 2*C) row tile (h-pair split, w-pair interleaved on lanes)
    # o_ref: (th, Wo, C)
    C = o_ref.shape[-1]
    r = jnp.maximum(x_ref[:, 0, :, :], x_ref[:, 1, :, :])    # max over the H pair
    o_ref[...] = jnp.maximum(r[:, :, :C], r[:, :, C:])       # max over the W pair


def maxpool2x2(x):
    """NHWC 2x2 max pool, stride 2 (floor).  Row-tiled over Ho for pipelining."""
    N, H, W, C = x.shape
    Ho, Wo = H // 2, W // 2
    if H != 2 * Ho or W != 2 * Wo:                 # floor semantics
        x = x[:, :2 * Ho, :2 * Wo, :]
    # Free, layout-preserving reshape: last dim packs [w-even ch | w-odd ch],
    # so the kernel needs no strided gather.
    xr = x.reshape(N, Ho, 2, Wo, 2 * C)
    # Largest divisor of Ho whose input block stays <= ~512 KiB.
    row_bytes = 2 * Wo * 2 * C * x.dtype.itemsize
    th = 1
    for cand in range(Ho, 0, -1):
        if Ho % cand == 0 and cand * row_bytes <= (512 << 10):
            th = cand
            break
    return pl.pallas_call(
        _maxpool2x2_kernel,
        out_shape=jax.ShapeDtypeStruct((N, Ho, Wo, C), x.dtype),
        grid=(N, Ho // th),
        in_specs=[pl.BlockSpec((None, th, 2, Wo, 2 * C),
                               lambda n, m: (n, m, 0, 0, 0))],
        out_specs=pl.BlockSpec((None, th, Wo, C), lambda n, m: (n, m, 0, 0)),
        compiler_params=pltpu.CompilerParams(
            dimension_semantics=("parallel", "parallel")),
    )(xr)


# ----------------------------------------------------------------------------
# VGG16 parameters + forward
# ----------------------------------------------------------------------------
_VGG_CONVS = [
    ("conv1_1", 3, 64), ("conv1_2", 64, 64),
    ("conv2_1", 64, 128), ("conv2_2", 128, 128),
    ("conv3_1", 128, 256), ("conv3_2", 256, 256), ("conv3_3", 256, 256),
    ("conv4_1", 256, 512), ("conv4_2", 512, 512), ("conv4_3", 512, 512),
    ("conv5_1", 512, 512),
    # conv5_2 / conv5_3 exist in torchvision VGG16 but the reference forward()
    # reuses the relu5_1 block for relu5_2/relu5_3, so those weights are unused.
]


def init_vgg16_params(key):
    # TODO(synk): the real module loads pretrained torchvision weights; here we
    # use deterministic He-style init of the same shapes (weights stored in
    # bf16, the dtype the kernels consume; biases stay f32).
    params = {}
    for i, (name, cin, cout) in enumerate(_VGG_CONVS):
        kw, kb = jax.random.split(jax.random.fold_in(key, i))
        w = jax.random.normal(kw, (3, 3, cin, cout), jnp.float32) * jnp.sqrt(2.0 / (9.0 * cin))
        b = 0.01 * jax.random.normal(kb, (cout,), jnp.float32)
        params[name] = (w.astype(jnp.bfloat16), b)
    return params


def vgg16_forward(x_nchw, params):
    x = jnp.transpose(x_nchw, (0, 2, 3, 1)).astype(jnp.bfloat16)   # NCHW -> NHWC, bf16

    def block(name, h, pool_first=False):
        if pool_first:
            h = maxpool2x2(h)
        w, b = params[name]
        return conv3x3_relu(h, w, b)

    relu1_1 = block("conv1_1", x)
    relu1_2 = block("conv1_2", relu1_1)
    relu2_1 = block("conv2_1", relu1_2, pool_first=True)
    relu2_2 = block("conv2_2", relu2_1)
    relu3_1 = block("conv3_1", relu2_2, pool_first=True)
    relu3_2 = block("conv3_2", relu3_1)
    relu3_3 = block("conv3_3", relu3_2)
    max_3 = maxpool2x2(relu3_3)
    relu4_1 = block("conv4_1", max_3)
    relu4_2 = block("conv4_2", relu4_1)
    relu4_3 = block("conv4_3", relu4_2)
    relu5_1 = block("conv5_1", relu4_3, pool_first=True)
    # Faithful to the PyTorch forward(): relu5_2/relu5_3 re-apply the relu5_1 block.
    relu5_2 = block("conv5_1", relu5_1, pool_first=True)
    relu5_3 = block("conv5_1", relu5_2, pool_first=True)

    nhwc = {
        "relu1_1": relu1_1, "relu1_2": relu1_2,
        "relu2_1": relu2_1, "relu2_2": relu2_2,
        "relu3_1": relu3_1, "relu3_2": relu3_2, "relu3_3": relu3_3,
        "max_3": max_3,
        "relu4_1": relu4_1, "relu4_2": relu4_2, "relu4_3": relu4_3,
        "relu5_1": relu5_1, "relu5_2": relu5_2, "relu5_3": relu5_3,
    }
    to_nchw = lambda a: jnp.transpose(a, (0, 3, 1, 2)).astype(jnp.float32)
    return {k: to_nchw(v) for k, v in nhwc.items()}


# ----------------------------------------------------------------------------
# main
# ----------------------------------------------------------------------------
if __name__ == "__main__":
    key = jax.random.PRNGKey(0)

    # ---- small standalone correctness checks vs. pure-JAX references ---------
    def conv_ref(x, w, b):
        y = jax.lax.conv_general_dilated(
            x.astype(jnp.float32), w.astype(jnp.float32),
            window_strides=(1, 1), padding="SAME",
            dimension_numbers=("NHWC", "HWIO", "NHWC"))
        return jnp.maximum(y + b.astype(jnp.float32), 0.0)

    def check_conv(seed, cin, cout, hw, tol=2e-2):
        k = jax.random.fold_in(key, seed)
        x = jax.random.normal(jax.random.fold_in(k, 0), (1, hw, hw, cin),
                              jnp.float32).astype(jnp.bfloat16)
        w = (jax.random.normal(jax.random.fold_in(k, 1), (3, 3, cin, cout),
                               jnp.float32) * jnp.sqrt(2.0 / (9.0 * cin))
             ).astype(jnp.bfloat16)
        b = 0.01 * jax.random.normal(jax.random.fold_in(k, 2), (cout,), jnp.float32)
        got = conv3x3_relu(x, w, b).astype(jnp.float32)
        ref = conv_ref(x, w, b)
        err = float(jnp.max(jnp.abs(got - ref))) / (float(jnp.max(jnp.abs(ref))) + 1e-6)
        assert err < tol, f"conv check (seed={seed}) rel err {err}"

    check_conv(11, 3, 64, 16)       # im2col path (K=27, single tap)
    check_conv(12, 32, 128, 16)     # kw-merged path (K=96, 3 taps)
    check_conv(13, 64, 128, 40)     # kw-merged + multiple row tiles
    check_conv(14, 128, 128, 16)    # 9-tap path, single row tile
    check_conv(15, 128, 64, 36)     # 9-tap path + multiple row tiles

    xp_chk = jax.random.normal(jax.random.fold_in(key, 99), (2, 16, 16, 64),
                               jnp.float32).astype(jnp.bfloat16)
    pool_got = maxpool2x2(xp_chk)
    pool_ref = jnp.max(xp_chk.reshape(2, 8, 2, 8, 2, 64), axis=(2, 4))
    assert bool(jnp.array_equal(pool_got, pool_ref)), "maxpool mismatch"

    # ---- full forward ---------------------------------------------------------
    params = init_vgg16_params(key)
    # NCHW input like the PyTorch module.  64x64 is the smallest spatial size
    # for which the forward's three successive relu5_1 pools stay >= 1x1.
    x = jax.random.normal(jax.random.fold_in(key, 1234), (2, 3, 64, 64), jnp.float32)

    fwd = jax.jit(vgg16_forward)
    out = fwd(x, params)
    jax.block_until_ready(out)

    assert out["relu1_1"].shape == (2, 64, 64, 64)
    assert out["relu2_2"].shape == (2, 128, 32, 32)
    assert out["max_3"].shape == (2, 256, 8, 8)
    assert out["relu4_3"].shape == (2, 512, 8, 8)
    assert out["relu5_1"].shape == (2, 512, 4, 4)
    assert out["relu5_3"].shape == (2, 512, 1, 1)
    assert out["relu1_1"].dtype == jnp.float32
    print("KERNEL_OK")
</pallas_src>

<mosaic_0001>
module attributes {stable_mosaic.version = 11 : i64} {
  func.func @_conv_relu_kernel(%arg0: i32, %arg1: i32, %arg2: i32, %arg3: memref<1x288x27xbf16, #tpu.memory_space<vmem>>, %arg4: memref<1x27x64xbf16, #tpu.memory_space<vmem>>, %arg5: memref<1x64xf32, #tpu.memory_space<vmem>>, %arg6: memref<1x288x64xbf16, #tpu.memory_space<vmem>>) attributes {dimension_semantics = [#tpu.dimension_semantics<parallel>, #tpu.dimension_semantics<parallel>, #tpu.dimension_semantics<parallel>], iteration_bounds = array<i64: 1, 1, 1>, scalar_prefetch = 0 : i64, scratch_operands = 0 : i64, tpu.core_type = #tpu.core_type<tc>, window_params = [{transform_indices = @transform_0, window_bounds = array<i64: 1, 288, 27>}, {transform_indices = @transform_1, window_bounds = array<i64: 1, 27, 64>}, {transform_indices = @transform_2, window_bounds = array<i64: 1, 64>}, {transform_indices = @transform_3, window_bounds = array<i64: 1, 288, 64>}]} {
    %cst = arith.constant 0.000000e+00 : f32
    %0 = vector.broadcast %cst : f32 to vector<288x64xf32>
    %c0 = arith.constant 0 : index
    %c0_0 = arith.constant 0 : index
    %c0_1 = arith.constant 0 : index
    %1 = vector.load %arg3[%c0, %c0_0, %c0_1] : memref<1x288x27xbf16, #tpu.memory_space<vmem>>, vector<1x288x27xbf16>
    %2 = vector.shape_cast %1 : vector<1x288x27xbf16> to vector<288x27xbf16>
    %c0_2 = arith.constant 0 : index
    %c0_3 = arith.constant 0 : index
    %c0_4 = arith.constant 0 : index
    %3 = vector.load %arg4[%c0_2, %c0_3, %c0_4] : memref<1x27x64xbf16, #tpu.memory_space<vmem>>, vector<1x27x64xbf16>
    %4 = vector.shape_cast %3 : vector<1x27x64xbf16> to vector<27x64xbf16>
    %cst_5 = arith.constant dense<0.000000e+00> : vector<288x64xf32>
    %5 = tpu.matmul %2, %4, %cst_5 {dimension_numbers = #tpu.dot_dimension_numbers<[1], [0], [0], [1], [0, 0, 1, 1], [], []>} : vector<288x27xbf16>, vector<27x64xbf16>, vector<288x64xf32> -> vector<288x64xf32>
    %6 = arith.addf %0, %5 : vector<288x64xf32>
    %c0_6 = arith.constant 0 : index
    %c0_7 = arith.constant 0 : index
    %7 = vector.load %arg5[%c0_6, %c0_7] : memref<1x64xf32, #tpu.memory_space<vmem>>, vector<1x64xf32>
    %8 = vector.broadcast %7 : vector<1x64xf32> to vector<288x64xf32>
    %9 = arith.addf %6, %8 : vector<288x64xf32>
    %cst_8 = arith.constant 0.000000e+00 : f32
    %10 = vector.broadcast %cst_8 : f32 to vector<288x64xf32>
    %11 = arith.maximumf %9, %10 : vector<288x64xf32>
    %12 = arith.truncf %11 : vector<288x64xf32> to vector<288x64xbf16>
    %c0_9 = arith.constant 0 : index
    %c0_10 = arith.constant 0 : index
    %c0_11 = arith.constant 0 : index
    %13 = vector.load %arg6[%c0_9, %c0_10, %c0_11] : memref<1x288x64xbf16, #tpu.memory_space<vmem>>, vector<1x288x64xbf16>
    %14 = vector.shape_cast %13 : vector<1x288x64xbf16> to vector<288x64xbf16>
    %15 = vector.shape_cast %12 : vector<288x64xbf16> to vector<1x288x64xbf16>
    tpu.vector_store %arg6[%c0_9, %c0_10, %c0_11], %15 {strides = array<i32>} : memref<1x288x64xbf16, #tpu.memory_space<vmem>>, vector<1x288x64xbf16>,
    return
  }
  func.func @transform_0(%arg0: i32, %arg1: i32, %arg2: i32) -> (i32, i32, i32) {
    %c1_i32 = arith.constant 1 : i32
    %0 = arith.muli %arg2, %c1_i32 : i32
    %1 = arith.addi %0, %arg1 : i32
    %c0_i32 = arith.constant 0 : i32
    %c0_i32_0 = arith.constant 0 : i32
    %c0_i32_1 = arith.constant 0 : i32
    return %1, %c0_i32, %c0_i32_0 : i32, i32, i32
  }
  func.func @transform_1(%arg0: i32, %arg1: i32, %arg2: i32) -> (i32, i32, i32) {
    %c0_i32 = arith.constant 0 : i32
    %c0_i32_0 = arith.constant 0 : i32
    %c0_i32_1 = arith.constant 0 : i32
    return %c0_i32, %c0_i32_0, %arg0 : i32, i32, i32
  }
  func.func @transform_2(%arg0: i32, %arg1: i32, %arg2: i32) -> (i32, i32) {
    %c0_i32 = arith.constant 0 : i32
    %c0_i32_0 = arith.constant 0 : i32
    return %c0_i32, %arg0 : i32, i32
  }
  func.func @transform_3(%arg0: i32, %arg1: i32, %arg2: i32) -> (i32, i32, i32) {
    %c0_i32 = arith.constant 0 : i32
    return %arg2, %arg1, %arg0 : i32, i32, i32
  }
}

</mosaic_0001>

<llo_original>
// kernel: tpu_custom_call.1
$region0: #{tpu_custom_call.1}
  #allocation0 [shape = 'u32[]', space=smem, size = 0x4, offset = 0x4, fixed_abs, tag = 'smem constant byte address 0x4 - core index']
  #allocation1 [shape = 'u32[72,128]{1,0:T(1,128)}', space=vmem, size = 0x9000, scoped, tag = 'internal scratch']
  %s0 = inlined_call_operand.vmem [shape: bf16[1,288,27], index: 0, kind: input, shape index: {}]
  %s1 = inlined_call_operand.vmem [shape: bf16[1,27,64], index: 1, kind: input, shape index: {}]
  %s2 = inlined_call_operand.vmem [shape: f32[1,64], index: 2, kind: input, shape index: {}]
  %s3 = inlined_call_operand.vmem [shape: bf16[1,288,64], index: 3, kind: output, shape index: {}]
  %s4 = sld [smem:[#allocation0]]
  $region22: #{tpu_custom_call.1} parent=0
    _
  %s6 = ssub.s32 1, %s4
  %s7 = scalar_select 0, %s6, %s4
  // Predicated region
  $region2: #{tpu_custom_call.1} parent=0 // pred_check
    _
  $region3: #{tpu_custom_call.1} parent=0 // pred_check_branch
    %9 = sbr.rel (0) target = $region5
  $region4: #{tpu_custom_call.1} parent=0 // pred_region
    %s10 = sadd.s32 0, 0
    %p11 = scmp.lt.s32.totalorder %s10, 0
    %s12 = scalar_select %p11, %s10, 0
    %s13 = smul.addr %s12, 36
    %s14 = smul.addr %s13, 4
    %s15 = scalar_lea.vmem %s0, %s14
    %s16 = sadd.s32 0, 0
  $region5: #{tpu_custom_call.1} parent=0 // pred_fallthru
    _
  // Predicated region
  $region6: #{tpu_custom_call.1} parent=0 // pred_check
    _
  $region7: #{tpu_custom_call.1} parent=0 // pred_check_branch
    %18 = sbr.rel (0) target = $region9
  $region8: #{tpu_custom_call.1} parent=0 // pred_region
    _
  $region9: #{tpu_custom_call.1} parent=0 // pred_fallthru
    _
  // Predicated region
  $region10: #{tpu_custom_call.1} parent=0 // pred_check
    _
  $region11: #{tpu_custom_call.1} parent=0 // pred_check_branch
    %20 = sbr.rel (0) target = $region13
  $region12: #{tpu_custom_call.1} parent=0 // pred_region
    _
  $region13: #{tpu_custom_call.1} parent=0 // pred_fallthru
    _
  %s21 = sadd.s32 0, 0
  %p22 = scmp.lt.s32.totalorder %s21, 0
  %s23 = scalar_select %p22, %s21, 0
  %s24 = smul.addr %s23, 36
  %s25 = smul.addr %s24, 4
  %s26 = scalar_lea.vmem %s0, %s25
  %s27 = sadd.s32 0, 0
  %p28 = scmp.lt.s32.totalorder %s27, 0
  %s29 = scalar_select %p28, %s27, 0
  %s30 = smul.addr %s29, 36
  %s31 = smul.addr %s30, 4
  %s32 = scalar_lea.vmem %s0, %s31
  %s33 = sadd.s32 0, 0
  %v35 = vld [vmem:[%s32] sm:$0xf]
  %v36 = vld [vmem:[%s32 + $0x4] sm:$0xf]
  %v37 = vld [vmem:[%s32 + $0x8] sm:$0xf]
  %v38 = vld [vmem:[%s32 + $0xc] sm:$0xf]
  %v39 = vld [vmem:[%s32 + $0x10] sm:$0xf]
  %v40 = vld [vmem:[%s32 + $0x14] sm:$0xf]
  %v41 = vld [vmem:[%s32 + $0x18] sm:$0xf]
  %v42 = vld [vmem:[%s32 + $0x1c] sm:$0xf]
  %v43 = vld [vmem:[%s32 + $0x20] sm:$0xf]
  %v44 = vld [vmem:[%s32 + $0x24] sm:$0xf]
  %v45 = vld [vmem:[%s32 + $0x28] sm:$0xf]
  %v46 = vld [vmem:[%s32 + $0x2c] sm:$0xf]
  %v47 = vld [vmem:[%s32 + $0x30] sm:$0xf]
  %v48 = vld [vmem:[%s32 + $0x34] sm:$0xf]
  %v49 = vld [vmem:[%s32 + $0x38] sm:$0xf]
  %v50 = vld [vmem:[%s32 + $0x3c] sm:$0xf]
  %v51 = vld [vmem:[%s32 + $0x40] sm:$0xf]
  %v52 = vld [vmem:[%s32 + $0x44] sm:$0xf]
  %v53 = vld [vmem:[%s32 + $0x48] sm:$0xf]
  %v54 = vld [vmem:[%s32 + $0x4c] sm:$0xf]
  %v55 = vld [vmem:[%s32 + $0x50] sm:$0xf]
  %v56 = vld [vmem:[%s32 + $0x54] sm:$0xf]
  %v57 = vld [vmem:[%s32 + $0x58] sm:$0xf]
  %v58 = vld [vmem:[%s32 + $0x5c] sm:$0xf]
  %v59 = vld [vmem:[%s32 + $0x60] sm:$0xf]
  %v60 = vld [vmem:[%s32 + $0x64] sm:$0xf]
  %v61 = vld [vmem:[%s32 + $0x68] sm:$0xf]
  %v62 = vld [vmem:[%s32 + $0x6c] sm:$0xf]
  %v63 = vld [vmem:[%s32 + $0x70] sm:$0xf]
  %v64 = vld [vmem:[%s32 + $0x74] sm:$0xf]
  %v65 = vld [vmem:[%s32 + $0x78] sm:$0xf]
  %v66 = vld [vmem:[%s32 + $0x7c] sm:$0xf]
  %v67 = vld [vmem:[%s32 + $0x80] sm:$0xf]
  %v68 = vld [vmem:[%s32 + $0x84] sm:$0xf]
  %v69 = vld [vmem:[%s32 + $0x88] sm:$0xf]
  %v70 = vld [vmem:[%s32 + $0x8c] sm:$0xf]
  %v71 = vld [vmem:[%s1] sm:$0xf]
  %v72 = vld [vmem:[%s1 + $0x4] sm:$0xf]
  %v73 = vld [vmem:[%s1 + $0x8] sm:$0xf]
  %v74 = vld [vmem:[%s1 + $0xc] sm:$0x3]
  %v75 = vld [vmem:[%s2] sm:$0x1]
  %v77 = vperm.slane %v75, 0
  %v115 = vunpack.c.l.b16 %v35
  %v116 = vunpack.c.l.b16 %v36
  %v117 = vunpack.c.l.b16 %v37
  %v118 = vunpack.c.l.b16 %v38
  %v119 = vunpack.c.l.b16 %v39
  %v120 = vunpack.c.l.b16 %v40
  %v121 = vunpack.c.l.b16 %v41
  %v122 = vunpack.c.l.b16 %v42
  %v123 = vunpack.c.l.b16 %v43
  %v124 = vunpack.c.l.b16 %v44
  %v125 = vunpack.c.l.b16 %v45
  %v126 = vunpack.c.l.b16 %v46
  %v127 = vunpack.c.l.b16 %v47
  %v128 = vunpack.c.l.b16 %v48
  %v129 = vunpack.c.l.b16 %v49
  %v130 = vunpack.c.l.b16 %v50
  %v131 = vunpack.c.l.b16 %v51
  %v132 = vunpack.c.l.b16 %v52
  %v133 = vunpack.c.l.b16 %v53
  %v134 = vunpack.c.l.b16 %v54
  %v135 = vunpack.c.l.b16 %v55
  %v136 = vunpack.c.l.b16 %v56
  %v137 = vunpack.c.l.b16 %v57
  %v138 = vunpack.c.l.b16 %v58
  %v139 = vunpack.c.l.b16 %v59
  %v140 = vunpack.c.l.b16 %v60
  %v141 = vunpack.c.l.b16 %v61
  %v142 = vunpack.c.l.b16 %v62
  %v143 = vunpack.c.l.b16 %v63
  %v144 = vunpack.c.l.b16 %v64
  %v145 = vunpack.c.l.b16 %v65
  %v146 = vunpack.c.l.b16 %v66
  %v147 = vunpack.c.l.b16 %v67
  %v148 = vunpack.c.l.b16 %v68
  %v149 = vunpack.c.l.b16 %v69
  %v150 = vunpack.c.l.b16 %v70
  %v151 = vpack.c.b16 %v116, %v115
  %v152 = vpack.c.b16 %v118, %v117
  %v153 = vpack.c.b16 %v120, %v119
  %v154 = vpack.c.b16 %v122, %v121
  %v155 = vpack.c.b16 %v124, %v123
  %v156 = vpack.c.b16 %v126, %v125
  %v157 = vpack.c.b16 %v128, %v127
  %v158 = vpack.c.b16 %v130, %v129
  %v159 = vpack.c.b16 %v132, %v131
  %v160 = vpack.c.b16 %v134, %v133
  %v161 = vpack.c.b16 %v136, %v135
  %v162 = vpack.c.b16 %v138, %v137
  %v163 = vpack.c.b16 %v140, %v139
  %v164 = vpack.c.b16 %v142, %v141
  %v165 = vpack.c.b16 %v144, %v143
  %v166 = vpack.c.b16 %v146, %v145
  %v167 = vpack.c.b16 %v148, %v147
  %v168 = vpack.c.b16 %v150, %v149
  %v173 = vunpack.c.l.b16 %v71
  %v174 = vunpack.c.l.b16 %v72
  %v175 = vunpack.c.l.b16 %v73
  %v176 = vunpack.c.l.b16 %v74
  %v177 = vpack.c.b16 %v174, %v173
  %v178 = vpack.c.b16 %v176, %v175
  %vm180 = vcmask 220160
  %v182 = vsel %vm180, %v151, 0
  %v185 = vsel %vm180, %v152, 0
  %v188 = vsel %vm180, %v153, 0
  %v191 = vsel %vm180, %v154, 0
  %v194 = vsel %vm180, %v155, 0
  %v197 = vsel %vm180, %v156, 0
  %v200 = vsel %vm180, %v157, 0
  %v203 = vsel %vm180, %v158, 0
  %v206 = vsel %vm180, %v159, 0
  %v209 = vsel %vm180, %v160, 0
  %v212 = vsel %vm180, %v161, 0
  %v215 = vsel %vm180, %v162, 0
  %v218 = vsel %vm180, %v163, 0
  %v221 = vsel %vm180, %v164, 0
  %v224 = vsel %vm180, %v165, 0
  %v227 = vsel %vm180, %v166, 0
  %v230 = vsel %vm180, %v167, 0
  %v233 = vsel %vm180, %v168, 0
  %vm235 = vcmask 1044480
  %vm236 = vcmask 1045504
  %v237 = vsel %vm235, 4294967295, 65535
  %v238 = vsel %vm236, %v237, 0
  %v240 = vand.u32 %v178, %v238
  %242 = vmatpush.bf16.msra.mxu0 0
  %243 = vmatpush.bf16.msra.mxu0 0
  %244 = vmatpush.bf16.msra.mxu0 0
  %245 = vmatpush.bf16.msra.mxu0 0
  %246 = vmatpush.bf16.msra.mxu0 0
  %247 = vmatpush.bf16.msra.mxu0 0
  %248 = vmatpush.bf16.msra.mxu0 %v240
  %249 = vmatpush.bf16.msra.mxu0 %v177
  %250 = vmatmul.bf16.gmra.mxu0 %v182
  %v251 = vpop.f32.mrf.mxu0
  %v252 = vadd.f32 %v77, %v251
  %v253 = vpop.f32.mrf.mxu0
  %v254 = vadd.f32 %v77, %v253
  %255 = vmatmul.bf16.gmra.mxu0 %v185
  %v256 = vpop.f32.mrf.mxu0
  %v257 = vadd.f32 %v77, %v256
  %v258 = vpop.f32.mrf.mxu0
  %v259 = vadd.f32 %v77, %v258
  %260 = vmatmul.bf16.gmra.mxu0 %v188
  %v261 = vpop.f32.mrf.mxu0
  %v262 = vadd.f32 %v77, %v261
  %v263 = vpop.f32.mrf.mxu0
  %v264 = vadd.f32 %v77, %v263
  %265 = vmatmul.bf16.gmra.mxu0 %v191
  %v266 = vpop.f32.mrf.mxu0
  %v267 = vadd.f32 %v77, %v266
  %v268 = vpop.f32.mrf.mxu0
  %v269 = vadd.f32 %v77, %v268
  %270 = vmatmul.bf16.gmra.mxu0 %v194
  %v271 = vpop.f32.mrf.mxu0
  %v272 = vadd.f32 %v77, %v271
  %v273 = vpop.f32.mrf.mxu0
  %v274 = vadd.f32 %v77, %v273
  %275 = vmatmul.bf16.gmra.mxu0 %v197
  %v276 = vpop.f32.mrf.mxu0
  %v277 = vadd.f32 %v77, %v276
  %v278 = vpop.f32.mrf.mxu0
  %v279 = vadd.f32 %v77, %v278
  %280 = vmatmul.bf16.gmra.mxu0 %v200
  %v281 = vpop.f32.mrf.mxu0
  %v282 = vadd.f32 %v77, %v281
  %v283 = vpop.f32.mrf.mxu0
  %v284 = vadd.f32 %v77, %v283
  %285 = vmatmul.bf16.gmra.mxu0 %v203
  %v286 = vpop.f32.mrf.mxu0
  %v287 = vadd.f32 %v77, %v286
  %v288 = vpop.f32.mrf.mxu0
  %v289 = vadd.f32 %v77, %v288
  %290 = vmatmul.bf16.gmra.mxu0 %v206
  %v291 = vpop.f32.mrf.mxu0
  %v292 = vadd.f32 %v77, %v291
  %v293 = vpop.f32.mrf.mxu0
  %v294 = vadd.f32 %v77, %v293
  %295 = vmatmul.bf16.gmra.mxu0 %v209
  %v296 = vpop.f32.mrf.mxu0
  %v297 = vadd.f32 %v77, %v296
  %v298 = vpop.f32.mrf.mxu0
  %v299 = vadd.f32 %v77, %v298
  %300 = vmatmul.bf16.gmra.mxu0 %v212
  %v301 = vpop.f32.mrf.mxu0
  %v302 = vadd.f32 %v77, %v301
  %v303 = vpop.f32.mrf.mxu0
  %v304 = vadd.f32 %v77, %v303
  %305 = vmatmul.bf16.gmra.mxu0 %v215
  %v306 = vpop.f32.mrf.mxu0
  %v307 = vadd.f32 %v77, %v306
  %v308 = vpop.f32.mrf.mxu0
  %v309 = vadd.f32 %v77, %v308
  %310 = vmatmul.bf16.gmra.mxu0 %v218
  %v311 = vpop.f32.mrf.mxu0
  %v312 = vadd.f32 %v77, %v311
  %v313 = vpop.f32.mrf.mxu0
  %v314 = vadd.f32 %v77, %v313
  %315 = vmatmul.bf16.gmra.mxu0 %v221
  %v316 = vpop.f32.mrf.mxu0
  %v317 = vadd.f32 %v77, %v316
  %v318 = vpop.f32.mrf.mxu0
  %v319 = vadd.f32 %v77, %v318
  %320 = vmatmul.bf16.gmra.mxu0 %v224
  %v321 = vpop.f32.mrf.mxu0
  %v322 = vadd.f32 %v77, %v321
  %v323 = vpop.f32.mrf.mxu0
  %v324 = vadd.f32 %v77, %v323
  %325 = vmatmul.bf16.gmra.mxu0 %v227
  %v326 = vpop.f32.mrf.mxu0
  %v327 = vadd.f32 %v77, %v326
  %v328 = vpop.f32.mrf.mxu0
  %v329 = vadd.f32 %v77, %v328
  %330 = vmatmul.bf16.gmra.mxu0 %v230
  %v331 = vpop.f32.mrf.mxu0
  %v332 = vadd.f32 %v77, %v331
  %v333 = vpop.f32.mrf.mxu0
  %v334 = vadd.f32 %v77, %v333
  %335 = vmatmul.bf16.gmra.mxu0 %v233
  %v336 = vpop.f32.mrf.mxu0
  %v337 = vadd.f32 %v77, %v336
  %v338 = vpop.f32.mrf.mxu0
  %v339 = vadd.f32 %v77, %v338
  %340 = vdwg.mxu0
  %v341 = vmax.f32 %v252, 0.0
  %v342 = vmax.f32 %v254, 0.0
  %v343 = vmax.f32 %v257, 0.0
  %v344 = vmax.f32 %v259, 0.0
  %v345 = vmax.f32 %v262, 0.0
  %v346 = vmax.f32 %v264, 0.0
  %v347 = vmax.f32 %v267, 0.0
  %v348 = vmax.f32 %v269, 0.0
  %v349 = vmax.f32 %v272, 0.0
  %v350 = vmax.f32 %v274, 0.0
  %v351 = vmax.f32 %v277, 0.0
  %v352 = vmax.f32 %v279, 0.0
  %v353 = vmax.f32 %v282, 0.0
  %v354 = vmax.f32 %v284, 0.0
  %v355 = vmax.f32 %v287, 0.0
  %v356 = vmax.f32 %v289, 0.0
  %v357 = vmax.f32 %v292, 0.0
  %v358 = vmax.f32 %v294, 0.0
  %v359 = vmax.f32 %v297, 0.0
  %v360 = vmax.f32 %v299, 0.0
  %v361 = vmax.f32 %v302, 0.0
  %v362 = vmax.f32 %v304, 0.0
  %v363 = vmax.f32 %v307, 0.0
  %v364 = vmax.f32 %v309, 0.0
  %v365 = vmax.f32 %v312, 0.0
  %v366 = vmax.f32 %v314, 0.0
  %v367 = vmax.f32 %v317, 0.0
  %v368 = vmax.f32 %v319, 0.0
  %v369 = vmax.f32 %v322, 0.0
  %v370 = vmax.f32 %v324, 0.0
  %v371 = vmax.f32 %v327, 0.0
  %v372 = vmax.f32 %v329, 0.0
  %v373 = vmax.f32 %v332, 0.0
  %v374 = vmax.f32 %v334, 0.0
  %v375 = vmax.f32 %v337, 0.0
  %v376 = vmax.f32 %v339, 0.0
  %v377 = vpack.c.bf16 %v341, %v341
  %v378 = vpack.c.bf16 %v342, %v342
  %v379 = vpack.c.bf16 %v343, %v343
  %v380 = vpack.c.bf16 %v344, %v344
  %v381 = vpack.c.bf16 %v345, %v345
  %v382 = vpack.c.bf16 %v346, %v346
  %v383 = vpack.c.bf16 %v347, %v347
  %v384 = vpack.c.bf16 %v348, %v348
  %v385 = vpack.c.bf16 %v349, %v349
  %v386 = vpack.c.bf16 %v350, %v350
  %v387 = vpack.c.bf16 %v351, %v351
  %v388 = vpack.c.bf16 %v352, %v352
  %v389 = vpack.c.bf16 %v353, %v353
  %v390 = vpack.c.bf16 %v354, %v354
  %v391 = vpack.c.bf16 %v355, %v355
  %v392 = vpack.c.bf16 %v356, %v356
  %v393 = vpack.c.bf16 %v357, %v357
  %v394 = vpack.c.bf16 %v358, %v358
  %v395 = vpack.c.bf16 %v359, %v359
  %v396 = vpack.c.bf16 %v360, %v360
  %v397 = vpack.c.bf16 %v361, %v361
  %v398 = vpack.c.bf16 %v362, %v362
  %v399 = vpack.c.bf16 %v363, %v363
  %v400 = vpack.c.bf16 %v364, %v364
  %v401 = vpack.c.bf16 %v365, %v365
  %v402 = vpack.c.bf16 %v366, %v366
  %v403 = vpack.c.bf16 %v367, %v367
  %v404 = vpack.c.bf16 %v368, %v368
  %v405 = vpack.c.bf16 %v369, %v369
  %v406 = vpack.c.bf16 %v370, %v370
  %v407 = vpack.c.bf16 %v371, %v371
  %v408 = vpack.c.bf16 %v372, %v372
  %v409 = vpack.c.bf16 %v373, %v373
  %v410 = vpack.c.bf16 %v374, %v374
  %v411 = vpack.c.bf16 %v375, %v375
  %v412 = vpack.c.bf16 %v376, %v376
  %vm413 = vcmask 519168
  %414 = vst.msk [vmem:[%s3] sm:$0xf] %vm413, %v377
  %415 = vst.msk [vmem:[%s3 + $0x4] sm:$0xf] %vm413, %v378
  %416 = vst.msk [vmem:[%s3 + $0x8] sm:$0xf] %vm413, %v379
  %417 = vst.msk [vmem:[%s3 + $0xc] sm:$0xf] %vm413, %v380
  %418 = vst.msk [vmem:[%s3 + $0x10] sm:$0xf] %vm413, %v381
  %419 = vst.msk [vmem:[%s3 + $0x14] sm:$0xf] %vm413, %v382
  %420 = vst.msk [vmem:[%s3 + $0x18] sm:$0xf] %vm413, %v383
  %421 = vst.msk [vmem:[%s3 + $0x1c] sm:$0xf] %vm413, %v384
  %422 = vst.msk [vmem:[%s3 + $0x20] sm:$0xf] %vm413, %v385
  %423 = vst.msk [vmem:[%s3 + $0x24] sm:$0xf] %vm413, %v386
  %424 = vst.msk [vmem:[%s3 + $0x28] sm:$0xf] %vm413, %v387
  %425 = vst.msk [vmem:[%s3 + $0x2c] sm:$0xf] %vm413, %v388
  %426 = vst.msk [vmem:[%s3 + $0x30] sm:$0xf] %vm413, %v389
  %427 = vst.msk [vmem:[%s3 + $0x34] sm:$0xf] %vm413, %v390
  %428 = vst.msk [vmem:[%s3 + $0x38] sm:$0xf] %vm413, %v391
  %429 = vst.msk [vmem:[%s3 + $0x3c] sm:$0xf] %vm413, %v392
  %430 = vst.msk [vmem:[%s3 + $0x40] sm:$0xf] %vm413, %v393
  %431 = vst.msk [vmem:[%s3 + $0x44] sm:$0xf] %vm413, %v394
  %432 = vst.msk [vmem:[%s3 + $0x48] sm:$0xf] %vm413, %v395
  %433 = vst.msk [vmem:[%s3 + $0x4c] sm:$0xf] %vm413, %v396
  %434 = vst.msk [vmem:[%s3 + $0x50] sm:$0xf] %vm413, %v397
  %435 = vst.msk [vmem:[%s3 + $0x54] sm:$0xf] %vm413, %v398
  %436 = vst.msk [vmem:[%s3 + $0x58] sm:$0xf] %vm413, %v399
  %437 = vst.msk [vmem:[%s3 + $0x5c] sm:$0xf] %vm413, %v400
  %438 = vst.msk [vmem:[%s3 + $0x60] sm:$0xf] %vm413, %v401
  %439 = vst.msk [vmem:[%s3 + $0x64] sm:$0xf] %vm413, %v402
  %440 = vst.msk [vmem:[%s3 + $0x68] sm:$0xf] %vm413, %v403
  %441 = vst.msk [vmem:[%s3 + $0x6c] sm:$0xf] %vm413, %v404
  %442 = vst.msk [vmem:[%s3 + $0x70] sm:$0xf] %vm413, %v405
  %443 = vst.msk [vmem:[%s3 + $0x74] sm:$0xf] %vm413, %v406
  %444 = vst.msk [vmem:[%s3 + $0x78] sm:$0xf] %vm413, %v407
  %445 = vst.msk [vmem:[%s3 + $0x7c] sm:$0xf] %vm413, %v408
  %446 = vst.msk [vmem:[%s3 + $0x80] sm:$0xf] %vm413, %v409
  %447 = vst.msk [vmem:[%s3 + $0x84] sm:$0xf] %vm413, %v410
  %448 = vst.msk [vmem:[%s3 + $0x88] sm:$0xf] %vm413, %v411
  %449 = vst.msk [vmem:[%s3 + $0x8c] sm:$0xf] %vm413, %v412
  // Predicated region
  $region14: #{tpu_custom_call.1} parent=0 // pred_check
    _
  $region15: #{tpu_custom_call.1} parent=0 // pred_check_branch
    %451 = sbr.rel (0) target = $region17
  $region16: #{tpu_custom_call.1} parent=0 // pred_region
    _
  $region17: #{tpu_custom_call.1} parent=0 // pred_fallthru
    _
  // Predicated region
  $region18: #{tpu_custom_call.1} parent=0 // pred_check
    _
  $region19: #{tpu_custom_call.1} parent=0 // pred_check_branch
    %453 = sbr.rel (0) target = $region21
  $region20: #{tpu_custom_call.1} parent=0 // pred_region
    _
  $region21: #{tpu_custom_call.1} parent=0 // pred_fallthru
    _

</llo_original>
